<compile_context>
chip_gen: v7x
topology: tpu7x:2x2x1
jax: 0.10.0
libtpu: 0.0.40
codegen_flags: <defaults>
</compile_context>

<pallas_src>
import functools
import math

import jax
import jax.numpy as jnp
from jax.experimental import pallas as pl
from jax.experimental.pallas import tpu as pltpu


# ----------------------------------------------------------------------------
# Tunables / helpers
# ----------------------------------------------------------------------------
_VMEM_LIMIT_BYTES = 32 * 1024 * 1024          # explicit scoped-VMEM limit (all gens)
_PIPELINE_BUDGET_BYTES = 20 * 1024 * 1024     # double-buffered block budget
_MIN_PALLAS_ELEMS = 256 * 1024                # below this the idx path stays in XLA
_LANE_WIDTH = 1024                            # 8 full vregs wide -> unmasked vst


def _round_up(a, b):
    return ((a + b - 1) // b) * b


def _choose_width_tile(W):
    """Width tile: full width when small / unaligned, else a divisor of W that is
    a multiple of 128 (keeps every store unmasked, no ragged column block)."""
    if W % 128 != 0 or W <= 2048:
        return W
    best = 128
    d = 256
    while d <= 2048:
        if W % d == 0:
            best = d
        d += 128
    return best


def _choose_row_tile(num_rows, row_pipeline_bytes):
    """Rows per block from the double-buffered VMEM budget; keep >= 4 grid steps
    (2 per TensorCore on v7x) and prefer an even step count."""
    if num_rows <= 8:
        return num_rows
    tb = max(8, (_PIPELINE_BUDGET_BYTES // max(row_pipeline_bytes, 1)) // 8 * 8)
    if num_rows >= 32:
        tb = min(tb, max(8, _round_up(pl.cdiv(num_rows, 4), 8)))
    tb = min(tb, max(8, (num_rows // 8) * 8))
    steps = pl.cdiv(num_rows, tb)
    if steps > 1 and steps % 2 == 1:
        tb2 = max(8, _round_up(pl.cdiv(num_rows, steps + 1), 8))
        if tb2 <= tb and pl.cdiv(num_rows, tb2) % 2 == 0:
            tb = tb2
    return tb


# ----------------------------------------------------------------------------
# Kernels
# ----------------------------------------------------------------------------
def _gen_sigmoid_kernel(x_ref, beta_ref, bias_ref, c0_ref, o_ref, *, use_log1p):
    """idx=None path: beta/bias/c0 are resident (1, td) rows broadcast over rows."""
    x = x_ref[...].astype(jnp.float32)          # (tb, td)
    beta = beta_ref[...].astype(jnp.float32)    # (1, td)
    bias = bias_ref[...].astype(jnp.float32)    # (1, td)
    c0 = c0_ref[...].astype(jnp.float32)        # (1, td) = sigmoid(bias), hoisted
    if use_log1p:
        x = jnp.log1p(x)
    o_ref[...] = (jax.nn.sigmoid(x * beta + bias) - c0).astype(o_ref.dtype)


def _gen_sigmoid_gathered_kernel(x_ref, beta_ref, bias_ref, o_ref, *, use_log1p):
    """idx path: beta/bias already gathered to x's flattened lane-dense shape.

    sigmoid(bias) is computed in-kernel (EUP): the kernel is HBM-bound, so the
    extra transcendentals are hidden and we avoid a third full-size HBM stream.
    """
    x = x_ref[...].astype(jnp.float32)
    beta = beta_ref[...].astype(jnp.float32)
    bias = bias_ref[...].astype(jnp.float32)
    if use_log1p:
        x = jnp.log1p(x)
    o_ref[...] = (jax.nn.sigmoid(x * beta + bias)
                  - jax.nn.sigmoid(bias)).astype(o_ref.dtype)


# ----------------------------------------------------------------------------
# Wrappers
# ----------------------------------------------------------------------------
def _dense_forward(x, beta, bias, use_log1p):
    """idx=None path: x is (B, D), beta/bias are (1, D)."""
    B, D = x.shape
    itemsize = jnp.dtype(x.dtype).itemsize
    c0 = jax.nn.sigmoid(bias.astype(jnp.float32))          # hoisted, (1, D)

    # Lane-dense folding for D % 128 != 0: view x as (B//g, g*D) and tile the
    # (1, D) params to (1, g*D).  Zero extra HBM traffic, unmasked stores.
    g = 1
    if D % 128 != 0:
        g = 128 // math.gcd(D, 128)
        if B % g != 0:
            g = 1                                           # correct fallback
    rows, W = B // g, g * D
    x2 = x.reshape(rows, W)
    beta_w = jnp.tile(beta, (1, g)) if g > 1 else beta
    bias_w = jnp.tile(bias, (1, g)) if g > 1 else bias
    c0_w = jnp.tile(c0, (1, g)) if g > 1 else c0

    td = _choose_width_tile(W)
    row_bytes = 2 * td * (itemsize + itemsize)              # (x + out) double-buffered
    tb = _choose_row_tile(rows, row_bytes)
    grid = (pl.cdiv(rows, tb), pl.cdiv(W, td))

    out = pl.pallas_call(
        functools.partial(_gen_sigmoid_kernel, use_log1p=use_log1p),
        out_shape=jax.ShapeDtypeStruct((rows, W), x.dtype),
        grid_spec=pltpu.PrefetchScalarGridSpec(
            num_scalar_prefetch=0,
            grid=grid,
            in_specs=[
                pl.BlockSpec((tb, td), lambda i, j: (i, j)),
                pl.BlockSpec((1, td), lambda i, j: (0, j)),   # beta row
                pl.BlockSpec((1, td), lambda i, j: (0, j)),   # bias row
                pl.BlockSpec((1, td), lambda i, j: (0, j)),   # c0 = sigmoid(bias)
            ],
            out_specs=pl.BlockSpec((tb, td), lambda i, j: (i, j)),
        ),
        compiler_params=pltpu.CompilerParams(
            dimension_semantics=("parallel", "parallel"),
            vmem_limit_bytes=_VMEM_LIMIT_BYTES),
    )(x2, beta_w, bias_w, c0_w)
    return out.reshape(B, D)


def _gathered_forward(x, beta_row, bias_row, idx, use_log1p, param_dtype):
    """idx path: flatten to a lane-dense (R, 1024) slab; gather params directly
    into that padded layout (no triple-pad, no pre-pad gather copies)."""
    orig_shape = x.shape
    out_dtype = x.dtype
    N = x.size
    L = _LANE_WIDTH
    R = pl.cdiv(N, L)
    pad = R * L - N

    xf = x.reshape(-1)
    idxf = idx.reshape(-1).astype(jnp.int32)
    if pad:
        xf = jnp.pad(xf, (0, pad))
        idxf = jnp.pad(idxf, (0, pad))                       # pad index 0: in-bounds
    x2 = xf.reshape(R, L)

    # TODO(synk): move this gather in-kernel (resident (1, D) tables + one-hot
    # MXU dot or Mosaic dynamic gather) to drop both full-size param streams.
    beta_g = beta_row.astype(param_dtype)[idxf].reshape(R, L)
    bias_g = bias_row.astype(param_dtype)[idxf].reshape(R, L)

    x_item = jnp.dtype(x.dtype).itemsize
    p_item = jnp.dtype(param_dtype).itemsize
    row_bytes = 2 * L * (x_item + 2 * p_item + jnp.dtype(out_dtype).itemsize)
    tr = _choose_row_tile(R, row_bytes)

    out = pl.pallas_call(
        functools.partial(_gen_sigmoid_gathered_kernel, use_log1p=use_log1p),
        out_shape=jax.ShapeDtypeStruct((R, L), out_dtype),
        grid_spec=pltpu.PrefetchScalarGridSpec(
            num_scalar_prefetch=0,
            grid=(pl.cdiv(R, tr),),
            in_specs=[
                pl.BlockSpec((tr, L), lambda i: (i, 0)),
                pl.BlockSpec((tr, L), lambda i: (i, 0)),
                pl.BlockSpec((tr, L), lambda i: (i, 0)),
            ],
            out_specs=pl.BlockSpec((tr, L), lambda i: (i, 0)),
        ),
        compiler_params=pltpu.CompilerParams(
            dimension_semantics=("parallel",),
            vmem_limit_bytes=_VMEM_LIMIT_BYTES),
    )(x2, beta_g, bias_g)
    return out.reshape(-1)[:N].reshape(orig_shape)


def generalized_sigmoid_forward(x, beta, bias, nonlin="sigm", idx=None,
                                gathered_param_dtype=jnp.float32,
                                min_pallas_elems=_MIN_PALLAS_ELEMS):
    """Pallas equivalent of GeneralizedSigmoid.forward.

    x    : (B, D) float array when idx is None; any shape matching idx otherwise.
    beta : (1, D)   bias : (1, D)
    gathered_param_dtype: dtype of the gathered beta/bias streams in the idx
        path (jnp.bfloat16 cuts kernel HBM traffic ~25% at ~1e-3 abs error).
    """
    if nonlin is None:
        return x
    assert nonlin in ("sigm", "logsigm")
    use_log1p = nonlin == "logsigm"

    if idx is not None:
        idx = jnp.asarray(idx)
        res_shape = jnp.broadcast_shapes(x.shape, idx.shape)
        x_b = jnp.broadcast_to(x, res_shape)
        idx_b = jnp.broadcast_to(idx, res_shape)
        if x_b.size < min_pallas_elems:
            # Small-problem fallback (the common chemCPA (B,) doses / drug-id
            # call): fixed pallas_call + pad/reshape glue would dwarf the HBM
            # time; XLA fuses the elementwise op into its neighbors.
            beta_g = beta[0][idx_b]
            bias_g = bias[0][idx_b]
            xx = jnp.log1p(x_b) if use_log1p else x_b
            return (jax.nn.sigmoid(xx * beta_g + bias_g)
                    - jax.nn.sigmoid(bias_g)).astype(x.dtype)
        return _gathered_forward(x_b, beta[0], bias[0], idx_b, use_log1p,
                                 gathered_param_dtype)

    # idx is None: broadcast (1, D) params across the batch inside the kernel.
    return _dense_forward(x, beta, bias, use_log1p)


# ----------------------------------------------------------------------------
# Pure-JAX reference for validation
# ----------------------------------------------------------------------------
def _ref_forward(x, beta, bias, nonlin, idx=None):
    if nonlin is None:
        return x
    if idx is not None:
        beta = beta[0][idx]
        bias = bias[0][idx]
    xx = jnp.log1p(x) if nonlin == "logsigm" else x
    return jax.nn.sigmoid(xx * beta + bias) - jax.nn.sigmoid(bias)


if __name__ == "__main__":
    key = jax.random.PRNGKey(0)
    k1, k2, k3, k4, k5, k6, k7 = jax.random.split(key, 7)

    ok = True

    # --- idx=None, D not 128-aligned (exercises the folded lane-dense path) ---
    B, D = 8, 32
    beta = jnp.ones((1, D), jnp.float32) + 0.1 * jax.random.normal(k1, (1, D), jnp.float32)
    bias = jnp.zeros((1, D), jnp.float32) + 0.1 * jax.random.normal(k2, (1, D), jnp.float32)
    x = jax.random.uniform(k3, (B, D), jnp.float32, minval=0.0, maxval=2.0)
    for nonlin in ("sigm", "logsigm"):
        out = jax.block_until_ready(generalized_sigmoid_forward(x, beta, bias, nonlin=nonlin))
        ref = _ref_forward(x, beta, bias, nonlin)
        ok &= bool(jnp.allclose(out, ref, atol=1e-5, rtol=1e-5))

    # --- idx=None, 128-aligned D (unfolded path) ---
    D2 = 128
    beta2 = jnp.ones((1, D2), jnp.float32)
    bias2 = 0.05 * jax.random.normal(k4, (1, D2), jnp.float32)
    x2 = jax.random.uniform(k5, (16, D2), jnp.float32, minval=0.0, maxval=2.0)
    out2 = jax.block_until_ready(
        generalized_sigmoid_forward(x2, beta2, bias2, nonlin="logsigm"))
    ok &= bool(jnp.allclose(out2, _ref_forward(x2, beta2, bias2, "logsigm"),
                            atol=1e-5, rtol=1e-5))

    # --- idx path, 2-D, forced through the Pallas gathered kernel ---
    idx2d = jax.random.randint(k6, (B, D), 0, D)
    out_idx = jax.block_until_ready(generalized_sigmoid_forward(
        x, beta, bias, nonlin="logsigm", idx=idx2d, min_pallas_elems=0))
    ok &= bool(jnp.allclose(out_idx, _ref_forward(x, beta, bias, "logsigm", idx2d),
                            atol=1e-5, rtol=1e-5))

    # bf16 gathered-param variant (reduced HBM traffic), looser tolerance.
    out_idx_bf16 = jax.block_until_ready(generalized_sigmoid_forward(
        x, beta, bias, nonlin="logsigm", idx=idx2d, min_pallas_elems=0,
        gathered_param_dtype=jnp.bfloat16))
    ok &= bool(jnp.allclose(out_idx_bf16, _ref_forward(x, beta, bias, "logsigm", idx2d),
                            atol=5e-3, rtol=5e-3))

    # --- idx path, 1-D (common chemCPA call) -> small-problem pure-JAX fallback ---
    x1d = jax.random.uniform(k7, (B,), jnp.float32, minval=0.0, maxval=2.0)
    idx1d = jax.random.randint(k6, (B,), 0, D)
    out1d = jax.block_until_ready(
        generalized_sigmoid_forward(x1d, beta, bias, nonlin="sigm", idx=idx1d))
    ok &= bool(jnp.allclose(out1d, _ref_forward(x1d, beta, bias, "sigm", idx1d),
                            atol=1e-5, rtol=1e-5))

    # --- nonlin=None identity (no kernel) ---
    ok &= bool(jnp.allclose(generalized_sigmoid_forward(x, beta, bias, nonlin=None), x))

    print("KERNEL_OK" if ok else "MISMATCH")
</pallas_src>

<mosaic_0001>
module attributes {stable_mosaic.version = 11 : i64} {
  func.func @_gen_sigmoid_kernel(%arg0: i32, %arg1: i32, %arg2: memref<2x128xf32, #tpu.memory_space<vmem>>, %arg3: memref<1x128xf32, #tpu.memory_space<vmem>>, %arg4: memref<1x128xf32, #tpu.memory_space<vmem>>, %arg5: memref<1x128xf32, #tpu.memory_space<vmem>>, %arg6: memref<2x128xf32, #tpu.memory_space<vmem>>) attributes {dimension_semantics = [#tpu.dimension_semantics<parallel>, #tpu.dimension_semantics<parallel>], iteration_bounds = array<i64: 1, 1>, scalar_prefetch = 0 : i64, scratch_operands = 0 : i64, tpu.core_type = #tpu.core_type<tc>, window_params = [{transform_indices = @transform_0, window_bounds = array<i64: 2, 128>}, {transform_indices = @transform_1, window_bounds = array<i64: 1, 128>}, {transform_indices = @transform_2, window_bounds = array<i64: 1, 128>}, {transform_indices = @transform_3, window_bounds = array<i64: 1, 128>}, {transform_indices = @transform_4, window_bounds = array<i64: 2, 128>}]} {
    %c0 = arith.constant 0 : index
    %c0_0 = arith.constant 0 : index
    %0 = vector.load %arg2[%c0, %c0_0] : memref<2x128xf32, #tpu.memory_space<vmem>>, vector<2x128xf32>
    %c0_1 = arith.constant 0 : index
    %c0_2 = arith.constant 0 : index
    %1 = vector.load %arg3[%c0_1, %c0_2] : memref<1x128xf32, #tpu.memory_space<vmem>>, vector<1x128xf32>
    %c0_3 = arith.constant 0 : index
    %c0_4 = arith.constant 0 : index
    %2 = vector.load %arg4[%c0_3, %c0_4] : memref<1x128xf32, #tpu.memory_space<vmem>>, vector<1x128xf32>
    %c0_5 = arith.constant 0 : index
    %c0_6 = arith.constant 0 : index
    %3 = vector.load %arg5[%c0_5, %c0_6] : memref<1x128xf32, #tpu.memory_space<vmem>>, vector<1x128xf32>
    %4 = vector.broadcast %1 : vector<1x128xf32> to vector<2x128xf32>
    %5 = arith.mulf %0, %4 : vector<2x128xf32>
    %6 = vector.broadcast %2 : vector<1x128xf32> to vector<2x128xf32>
    %7 = arith.addf %5, %6 : vector<2x128xf32>
    %8 = arith.negf %7 : vector<2x128xf32>
    %9 = math.exp %8 : vector<2x128xf32>
    %cst = arith.constant 1.000000e+00 : f32
    %10 = vector.broadcast %cst : f32 to vector<2x128xf32>
    %11 = arith.addf %10, %9 : vector<2x128xf32>
    %12 = arith.divf %10, %11 : vector<2x128xf32>
    %13 = vector.broadcast %3 : vector<1x128xf32> to vector<2x128xf32>
    %14 = arith.subf %12, %13 : vector<2x128xf32>
    %c0_7 = arith.constant 0 : index
    %c0_8 = arith.constant 0 : index
    %15 = vector.load %arg6[%c0_7, %c0_8] : memref<2x128xf32, #tpu.memory_space<vmem>>, vector<2x128xf32>
    tpu.vector_store %arg6[%c0_7, %c0_8], %14 {strides = array<i32>} : memref<2x128xf32, #tpu.memory_space<vmem>>, vector<2x128xf32>,
    return
  }
  func.func @transform_0(%arg0: i32, %arg1: i32) -> (i32, i32) {
    %c0_i32 = arith.constant 0 : i32
    return %arg0, %arg1 : i32, i32
  }
  func.func @transform_1(%arg0: i32, %arg1: i32) -> (i32, i32) {
    %c0_i32 = arith.constant 0 : i32
    %c0_i32_0 = arith.constant 0 : i32
    return %c0_i32, %arg1 : i32, i32
  }
  func.func @transform_2(%arg0: i32, %arg1: i32) -> (i32, i32) {
    %c0_i32 = arith.constant 0 : i32
    %c0_i32_0 = arith.constant 0 : i32
    return %c0_i32, %arg1 : i32, i32
  }
  func.func @transform_3(%arg0: i32, %arg1: i32) -> (i32, i32) {
    %c0_i32 = arith.constant 0 : i32
    %c0_i32_0 = arith.constant 0 : i32
    return %c0_i32, %arg1 : i32, i32
  }
  func.func @transform_4(%arg0: i32, %arg1: i32) -> (i32, i32) {
    %c0_i32 = arith.constant 0 : i32
    return %arg0, %arg1 : i32, i32
  }
}

</mosaic_0001>

<llo_original>
// kernel: tpu_custom_call.1
$region0: #{tpu_custom_call.1}
  #allocation0 [shape = 'u32[]', space=smem, size = 0x4, offset = 0x4, fixed_abs, tag = 'smem constant byte address 0x4 - core index']
  #allocation1 [shape = 'u32[144,128]{1,0:T(1,128)}', space=vmem, size = 0x12000, scoped, tag = 'internal scratch']
  %s0 = inlined_call_operand.hbm [shape: f32[2,128], index: 0, kind: input, shape index: {}]
  %s1 = inlined_call_operand.vmem [shape: f32[1,128], index: 1, kind: input, shape index: {}]
  %s2 = inlined_call_operand.vmem [shape: f32[1,128], index: 2, kind: input, shape index: {}]
  %s3 = inlined_call_operand.vmem [shape: f32[1,128], index: 3, kind: input, shape index: {}]
  %s4 = inlined_call_operand.hbm [shape: f32[2,128], index: 4, kind: output, shape index: {}]
  %s5 = sld [smem:[#allocation0]]
  $region30: #{tpu_custom_call.1} parent=0
    _
  %s7 = ssub.s32 1, %s5
  %s8 = scalar_select 0, %s7, %s5
  $region1: #{tpu_custom_call.1} parent=0
    #allocation2 [shape = 'u8[1024]{0}', space=vmem, size = 0x400, scoped, tag = 'input window, operand 0, single buffered']
    #allocation3 [shape = 's32[1]{0}', space=sflag, size = 0x4, scoped, tag = 'scoped memory for tpu_custom_call.1']
    #allocation4 [shape = 's32[1]{0}', space=sflag, size = 0x4, scoped, tag = 'scoped memory for tpu_custom_call.1']
    #allocation5 [shape = 'u8[1024]{0}', space=vmem, size = 0x400, scoped, tag = 'output window, operand 0, single buffered']
    %9 = vsyncpa [#allocation3], 0
    %10 = vsyncpa [#allocation4], 0
    // Predicated region
    $region2: #{tpu_custom_call.1} parent=1 // pred_check
      _
    $region3: #{tpu_custom_call.1} parent=1 // pred_check_branch
      %12 = sbr.rel (0) target = $region5
    $region4: #{tpu_custom_call.1} parent=1 // pred_region
      %s14 = ssub.s32 32, 32
      %15 = vsyncadd [#allocation3], %s14
      %s17 = sshll.u32 [#allocation2], 4
      %s18 = int_to_ptr.vmem [resolvable:$true] %s17
      %20 = dma.hbm_to_vmem [thread:$0]  %s0, 32, %s18, [#allocation3]
    $region5: #{tpu_custom_call.1} parent=1 // pred_fallthru
      _
    // Predicated region
    $region6: #{tpu_custom_call.1} parent=1 // pred_check
      _
    $region7: #{tpu_custom_call.1} parent=1 // pred_check_branch
      %22 = sbr.rel (0) target = $region9
    $region8: #{tpu_custom_call.1} parent=1 // pred_region
      _
    $region9: #{tpu_custom_call.1} parent=1 // pred_fallthru
      _
    // Predicated region
    $region10: #{tpu_custom_call.1} parent=1 // pred_check
      _
    $region11: #{tpu_custom_call.1} parent=1 // pred_check_branch
      %24 = sbr.rel (0) target = $region13
    $region12: #{tpu_custom_call.1} parent=1 // pred_region
      _
    $region13: #{tpu_custom_call.1} parent=1 // pred_fallthru
      _
    // Predicated region
    $region14: #{tpu_custom_call.1} parent=1 // pred_check
      _
    $region15: #{tpu_custom_call.1} parent=1 // pred_check_branch
      %26 = sbr.rel (0) target = $region17
    $region16: #{tpu_custom_call.1} parent=1 // pred_region
      _
    $region17: #{tpu_custom_call.1} parent=1 // pred_fallthru
      _
    // Predicated region
    $region18: #{tpu_custom_call.1} parent=1 // pred_check
      _
    $region19: #{tpu_custom_call.1} parent=1 // pred_check_branch
      %28 = sbr.rel (0) target = $region21
    $region20: #{tpu_custom_call.1} parent=1 // pred_region
      %29 = dma.done [#allocation3], 32
    $region21: #{tpu_custom_call.1} parent=1 // pred_fallthru
      _
    %v30 = vld [vmem:[#allocation2] sm:$0x3]
    %v31 = vld [vmem:[%s1] sm:$0x1]
    %v32 = vld [vmem:[%s2] sm:$0x1]
    %v33 = vld [vmem:[%s3] sm:$0x1]
    %v35 = vlaneseq
    %v36 = vshrl.u32 %v35, 7
    %v37 = vsub.s32 0, %v36
    %v38 = vrot.slane %v31, %v37
    %v40 = vmul.f32 %v30, %v38
    %v42 = vlaneseq
    %v43 = vshrl.u32 %v42, 7
    %v44 = vsub.s32 0, %v43
    %v45 = vrot.slane %v32, %v44
    %v47 = vadd.f32 %v40, %v45
    %v48 = vxor.u32 %v47, 2147483648
    %v49 = vmul.f32 %v48, 1.442695
    %v50 = vpow.pop %v49
    %v51 = vadd.f32 %v50, 1.0
    %v52 = vrcp.pop %v51
    %v53 = vmul.f32 1.0, %v52
    %v55 = vlaneseq
    %v56 = vshrl.u32 %v55, 7
    %v57 = vsub.s32 0, %v56
    %v58 = vrot.slane %v33, %v57
    %v60 = vsub.f32 %v53, %v58
    %61 = vst [vmem:[#allocation5] sm:$0x3] %v60
    // Predicated region
    $region22: #{tpu_custom_call.1} parent=1 // pred_check
      _
    $region23: #{tpu_custom_call.1} parent=1 // pred_check_branch
      %63 = sbr.rel (0) target = $region25
    $region24: #{tpu_custom_call.1} parent=1 // pred_region
      %s65 = ssub.s32 32, 32
      %66 = vsyncadd [#allocation4], %s65
      %s68 = sshll.u32 [#allocation5], 4
      %s69 = int_to_ptr.vmem [resolvable:$true] %s68
      %71 = dma.vmem_to_hbm [thread:$0]  %s69, 32, %s4, [#allocation4]
    $region25: #{tpu_custom_call.1} parent=1 // pred_fallthru
      _
    // Predicated region
    $region26: #{tpu_custom_call.1} parent=1 // pred_check
      _
    $region27: #{tpu_custom_call.1} parent=1 // pred_check_branch
      %73 = sbr.rel (0) target = $region29
    $region28: #{tpu_custom_call.1} parent=1 // pred_region
      %74 = dma.done [#allocation4], 32
    $region29: #{tpu_custom_call.1} parent=1 // pred_fallthru
      _
    %75 = vsyncpa [#allocation3], 1
    %76 = vsyncpa [#allocation4], 1

</llo_original>
